<compile_context>
chip_gen: v7x
topology: tpu7x:2x2x1
jax: 0.10.0
libtpu: 0.0.40
codegen_flags: <defaults>
</compile_context>

<pallas_src>
import functools

import jax
import jax.numpy as jnp
from jax.experimental import pallas as pl
from jax.experimental.pallas import tpu as pltpu


_NEG_BIG = -1e30  # finite "-inf" for masked (padded) kv columns


# ---------------------------------------------------------------------------
# Pass 1: GroupNorm (folded per-(b,c) scale/shift) + fused q/k/v projection.
# One stacked (3C, C) matmul per spatial tile; writes bf16 q/k/v to HBM once.
# ---------------------------------------------------------------------------
def _qkv_proj_kernel(x_ref, gns_ref, gnb_ref, w_ref, b_ref,
                     q_ref, k_ref, v_ref, *, c, scale):
    # GroupNorm as per-(batch, channel) affine; bf16 into the MXU.
    h = (x_ref[...] * gns_ref[...] + gnb_ref[...]).astype(jnp.bfloat16)   # (C, T)
    qkv = jnp.dot(w_ref[...], h,
                  preferred_element_type=jnp.float32) + b_ref[...]        # (3C, T)
    # C is a multiple of 8 -> sublane slices are free.
    q_ref[...] = (qkv[:c] * scale).astype(jnp.bfloat16)      # fold 1/sqrt(C) here
    k_ref[...] = qkv[c:2 * c].astype(jnp.bfloat16)
    v_ref[...] = qkv[2 * c:].astype(jnp.bfloat16)


# ---------------------------------------------------------------------------
# Pass 2: flash-style spatial attention + proj_out + residual.
# grid = (B, nq, nk) with the kv axis innermost ("arbitrary"); m / l / acc live
# in VMEM scratch with pl.when init/finalize.  The (HW, HW) score matrix is
# never materialized.
# ---------------------------------------------------------------------------
def _ssa_flash_kernel(q_ref, k_ref, v_ref, x_ref, wp_ref, bp_ref,
                      o_ref, m_scr, l_scr, acc_scr, *, tk, hw_real, hw_pad):
    ki = pl.program_id(2)
    nk = pl.num_programs(2)

    @pl.when(ki == 0)
    def _init():
        m_scr[...] = jnp.full(m_scr.shape, -jnp.inf, dtype=m_scr.dtype)
        l_scr[...] = jnp.zeros(l_scr.shape, dtype=l_scr.dtype)
        acc_scr[...] = jnp.zeros(acc_scr.shape, dtype=acc_scr.dtype)

    # scores in (TK, TQ) layout: s[j, i] = sum_c k[c, j] * q[c, i]
    # (explicit contraction dims -> no materialized transpose of k)
    s = jax.lax.dot_general(k_ref[...], q_ref[...],
                            dimension_numbers=(((0,), (0,)), ((), ())),
                            preferred_element_type=jnp.float32)           # (TK, TQ)

    if hw_pad != hw_real:  # static: only emit masking code when HW was padded
        col = ki * tk + jax.lax.broadcasted_iota(jnp.int32, (tk, 1), 0)
        s = jnp.where(col < hw_real, s, _NEG_BIG)

    # ---- online softmax update (fp32 elementwise) ----
    m_prev = m_scr[...]                                                   # (1, TQ)
    m_new = jnp.maximum(m_prev, jnp.max(s, axis=0, keepdims=True))        # (1, TQ)
    alpha = jnp.exp(m_prev - m_new)                                       # (1, TQ)
    p = jnp.exp(s - m_new)                                                # (TK, TQ)
    l_scr[...] = alpha * l_scr[...] + jnp.sum(p, axis=0, keepdims=True)
    acc_scr[...] = alpha * acc_scr[...] + jnp.dot(
        v_ref[...], p.astype(jnp.bfloat16),
        preferred_element_type=jnp.float32)                               # (C, TQ)
    m_scr[...] = m_new

    # ---- finalize: deferred softmax normalization, proj_out, residual ----
    @pl.when(ki == nk - 1)
    def _finalize():
        inv_l = pl.reciprocal(l_scr[...], approx=True)                    # EUP
        h_att = (acc_scr[...] * inv_l).astype(jnp.bfloat16)               # (C, TQ)
        o = jnp.dot(wp_ref[...], h_att,
                    preferred_element_type=jnp.float32) + bp_ref[...]
        o_ref[...] = (x_ref[...] + o).astype(o_ref.dtype)


# ---------------------------------------------------------------------------
# Wrapper helpers
# ---------------------------------------------------------------------------
def _pick_tile(hw_pad, target):
    """Largest multiple of 128 that divides hw_pad (a multiple of 128), <= target."""
    if hw_pad <= target:
        return hw_pad
    t = max((target // 128) * 128, 128)
    while hw_pad % t != 0:
        t -= 128
    return t


def _vmem_cap_bytes():
    """Generation-aware VMEM cap (v5e/v6e: ~96 MiB, v7x: ~48 MiB) with fallback."""
    try:
        cap = int(0.75 * pltpu.get_tpu_info().vmem_capacity_bytes)
        return max(cap, 32 * 2 ** 20)
    except Exception:
        return 48 * 2 ** 20   # conservative: always fits v7x's 64 MiB


def _proj_vmem_bytes(c, tp):
    f32, bf16 = 4, 2
    est = 0
    est += 2 * c * tp * f32                               # x tile (double buffered)
    est += 2 * 2 * c * 128 * f32                          # gn scale/shift (lane-padded)
    est += 2 * (3 * c * c * bf16 + 3 * c * 128 * f32)     # stacked weight + bias
    est += 3 * 2 * c * tp * bf16                          # q/k/v output tiles
    est += c * tp * bf16 + 3 * c * tp * f32               # h / qkv temporaries
    return est


def _flash_vmem_bytes(c, tq, tk):
    f32, bf16 = 4, 2
    est = 0
    est += 2 * c * tq * bf16                              # q tile
    est += 2 * 2 * c * tk * bf16                          # k + v tiles
    est += 2 * c * tq * f32                               # x residual tile
    est += 2 * c * tq * f32                               # output tile
    est += 2 * (c * c * bf16 + c * 128 * f32)             # wp + bp (lane-padded)
    est += c * tq * f32 + 2 * 8 * tq * f32                # acc + m + l scratch
    est += 2 * tk * tq * f32 + tk * tq * bf16             # s, p fp32 + p bf16
    est += 2 * c * tq * f32                               # misc elementwise temps
    return est


def spatial_self_attention(x_nchw, params, *, num_groups=32, eps=1e-6,
                           tq=256, tk=512, tp=512):
    B, C, H, W = x_nchw.shape
    assert C % num_groups == 0
    HW = H * W
    cg = C // num_groups

    # NCHW -> (B, C, HW): pure reshape, lane-dense layout, no HBM transpose.
    x = x_nchw.reshape(B, C, HW).astype(jnp.float32)

    # ---- GroupNorm stats (two-pass fp32, on the REAL data) folded into
    #      per-(batch, channel) scale/shift ----
    xg = x.reshape(B, num_groups, cg * HW)
    mean_g = jnp.mean(xg, axis=-1)                                    # (B, G)
    var_g = jnp.mean(jnp.square(xg - mean_g[..., None]), axis=-1)     # (B, G)
    inv_g = jax.lax.rsqrt(var_g + eps)
    mean_c = jnp.repeat(mean_g, cg, axis=1)                           # (B, C)
    inv_c = jnp.repeat(inv_g, cg, axis=1)                             # (B, C)
    gamma = params["gamma"].astype(jnp.float32)[None, :]
    beta = params["beta"].astype(jnp.float32)[None, :]
    gn_scale = (inv_c * gamma)[..., None]                             # (B, C, 1)
    gn_shift = (beta - mean_c * inv_c * gamma)[..., None]             # (B, C, 1)

    # ---- pad HW to a multiple of 128 so all tiles are lane-dense ----
    HW_pad = ((HW + 127) // 128) * 128
    x_p = jnp.pad(x, ((0, 0), (0, 0), (0, HW_pad - HW))) if HW_pad != HW else x

    tq_ = _pick_tile(HW_pad, tq)
    tk_ = _pick_tile(HW_pad, tk)
    tp_ = _pick_tile(HW_pad, tp)
    nq, nk, npj = HW_pad // tq_, HW_pad // tk_, HW_pad // tp_

    # ---- pack weights: stacked (3C, C) qkv weight (fused matmul), bf16 for MXU ----
    w_qkv = jnp.concatenate(
        [params["wq"].reshape(C, C), params["wk"].reshape(C, C),
         params["wv"].reshape(C, C)], axis=0).astype(jnp.bfloat16)    # (3C, C)
    b_qkv = jnp.concatenate(
        [params["bq"].reshape(C), params["bk"].reshape(C),
         params["bv"].reshape(C)], axis=0).reshape(3 * C, 1).astype(jnp.float32)
    w_p = params["wp"].reshape(C, C).astype(jnp.bfloat16)
    b_p = params["bp"].reshape(C, 1).astype(jnp.float32)

    cap = _vmem_cap_bytes()

    # ------------------ pass 1: GroupNorm + fused q/k/v projection ------------------
    proj_kernel = functools.partial(_qkv_proj_kernel, c=C, scale=float(C) ** (-0.5))
    bf16_hw = jax.ShapeDtypeStruct((B, C, HW_pad), jnp.bfloat16)
    gn_spec = pl.BlockSpec((None, C, 1), lambda b, t: (b, 0, 0))
    xt_spec = pl.BlockSpec((None, C, tp_), lambda b, t: (b, 0, t))

    q, k, v = pl.pallas_call(
        proj_kernel,
        out_shape=(bf16_hw, bf16_hw, bf16_hw),
        grid_spec=pltpu.PrefetchScalarGridSpec(
            num_scalar_prefetch=0,
            grid=(B, npj),
            in_specs=[
                xt_spec,
                gn_spec, gn_spec,
                pl.BlockSpec((3 * C, C), lambda b, t: (0, 0)),
                pl.BlockSpec((3 * C, 1), lambda b, t: (0, 0)),
            ],
            out_specs=(xt_spec, xt_spec, xt_spec),
        ),
        compiler_params=pltpu.CompilerParams(
            dimension_semantics=("parallel", "parallel"),
            vmem_limit_bytes=int(min(cap, max(32 * 2 ** 20,
                                              2 * _proj_vmem_bytes(C, tp_)))),
        ),
    )(x_p, gn_scale, gn_shift, w_qkv, b_qkv)

    # ------------------ pass 2: flash attention + proj_out + residual ------------------
    flash_kernel = functools.partial(_ssa_flash_kernel, tk=tk_,
                                     hw_real=HW, hw_pad=HW_pad)
    q_spec = pl.BlockSpec((None, C, tq_), lambda b, qi, ki: (b, 0, qi))
    kv_spec = pl.BlockSpec((None, C, tk_), lambda b, qi, ki: (b, 0, ki))
    xr_spec = pl.BlockSpec((None, C, tq_), lambda b, qi, ki: (b, 0, qi))
    out_spec = pl.BlockSpec((None, C, tq_), lambda b, qi, ki: (b, 0, qi))

    out = pl.pallas_call(
        flash_kernel,
        out_shape=jax.ShapeDtypeStruct((B, C, HW_pad), jnp.float32),
        grid_spec=pltpu.PrefetchScalarGridSpec(
            num_scalar_prefetch=0,
            grid=(B, nq, nk),
            in_specs=[
                q_spec, kv_spec, kv_spec, xr_spec,
                pl.BlockSpec((C, C), lambda b, qi, ki: (0, 0)),
                pl.BlockSpec((C, 1), lambda b, qi, ki: (0, 0)),
            ],
            out_specs=out_spec,
            scratch_shapes=[
                pltpu.VMEM((1, tq_), jnp.float32),    # running max   m
                pltpu.VMEM((1, tq_), jnp.float32),    # running denom l
                pltpu.VMEM((C, tq_), jnp.float32),    # output accumulator
            ],
        ),
        compiler_params=pltpu.CompilerParams(
            dimension_semantics=("parallel", "parallel", "arbitrary"),
            vmem_limit_bytes=int(min(cap, max(32 * 2 ** 20,
                                              2 * _flash_vmem_bytes(C, tq_, tk_)))),
        ),
    )(q, k, v, x_p, w_p, b_p)

    if HW_pad != HW:
        out = out[:, :, :HW]
    return out.reshape(B, C, H, W)


# ---------------------------------------------------------------------------
# Pure-JAX fp32 reference mirroring the PyTorch forward exactly.
# ---------------------------------------------------------------------------
def reference(x_nchw, params, *, num_groups=32, eps=1e-6):
    B, C, H, W = x_nchw.shape
    x = x_nchw.astype(jnp.float32)
    xg = x.reshape(B, num_groups, C // num_groups, H, W)
    mean = xg.mean(axis=(2, 3, 4), keepdims=True)
    var = xg.var(axis=(2, 3, 4), keepdims=True)
    h = ((xg - mean) / jnp.sqrt(var + eps)).reshape(B, C, H, W)
    h = h * params["gamma"].reshape(1, C, 1, 1) + params["beta"].reshape(1, C, 1, 1)

    def conv1x1(t, w, b):
        return jnp.einsum("bchw,oc->bohw", t, w.reshape(C, C)) + b.reshape(1, C, 1, 1)

    q = conv1x1(h, params["wq"], params["bq"])
    k = conv1x1(h, params["wk"], params["bk"])
    v = conv1x1(h, params["wv"], params["bv"])

    HW = H * W
    qf = jnp.transpose(q.reshape(B, C, HW), (0, 2, 1))       # (B, HW, C)
    kf = k.reshape(B, C, HW)                                 # (B, C, HW)
    w_ = jnp.einsum("bic,bcj->bij", qf, kf) * (float(C) ** (-0.5))
    w_ = jax.nn.softmax(w_, axis=2)
    vf = v.reshape(B, C, HW)
    hf = jnp.einsum("bcj,bij->bci", vf, w_)                  # (B, C, HW)
    h_ = hf.reshape(B, C, H, W)
    h_ = conv1x1(h_, params["wp"], params["bp"])
    return x + h_


if __name__ == "__main__":
    key = jax.random.PRNGKey(0)
    keys = jax.random.split(key, 11)

    B, C, H, W = 2, 32, 16, 16   # C must be divisible by GroupNorm's 32 groups
    x = jax.random.normal(keys[0], (B, C, H, W), dtype=jnp.float32)

    def init_w(k):
        return 0.1 * jax.random.normal(k, (C, C), dtype=jnp.float32)

    def init_b(k):
        return 0.05 * jax.random.normal(k, (C,), dtype=jnp.float32)

    params = {
        "gamma": 1.0 + 0.1 * jax.random.normal(keys[1], (C,), dtype=jnp.float32),
        "beta": 0.1 * jax.random.normal(keys[2], (C,), dtype=jnp.float32),
        "wq": init_w(keys[3]), "bq": init_b(keys[4]),
        "wk": init_w(keys[5]), "bk": init_b(keys[6]),
        "wv": init_w(keys[7]), "bv": init_b(keys[8]),
        "wp": init_w(keys[9]), "bp": init_b(keys[10]),
    }

    ref = jax.block_until_ready(reference(x, params))

    # Default tiles: HW = 256 -> single kv step per q-tile.
    out_single = jax.block_until_ready(spatial_self_attention(x, params))
    # Small tiles: grid (B, 2, 2) -> exercises the multi-step online-softmax loop.
    out_tiled = jax.block_until_ready(
        spatial_self_attention(x, params, tq=128, tk=128, tp=128))

    # bf16 MXU inputs + approx reciprocal -> looser tolerance than pure fp32.
    err_single = float(jnp.max(jnp.abs(out_single - ref)))
    err_tiled = float(jnp.max(jnp.abs(out_tiled - ref)))
    assert err_single < 3e-2, f"mismatch (single kv block) vs reference: {err_single}"
    assert err_tiled < 3e-2, f"mismatch (tiled kv loop) vs reference: {err_tiled}"

    # Non-multiple-of-128 spatial extent -> exercises HW padding + kv masking.
    Hp, Wp = 10, 12   # HW = 120 -> padded to 128
    xp = jax.random.normal(keys[0], (1, C, Hp, Wp), dtype=jnp.float32)
    ref_p = jax.block_until_ready(reference(xp, params))
    out_p = jax.block_until_ready(spatial_self_attention(xp, params))
    err_p = float(jnp.max(jnp.abs(out_p - ref_p)))
    assert err_p < 3e-2, f"mismatch (padded HW) vs reference: {err_p}"

    print("KERNEL_OK")
</pallas_src>

<mosaic_0001>
module attributes {stable_mosaic.version = 11 : i64} {
  func.func @_qkv_proj_kernel(%arg0: i32, %arg1: i32, %arg2: memref<1x32x256xf32, #tpu.memory_space<vmem>>, %arg3: memref<1x32x1xf32, #tpu.memory_space<vmem>>, %arg4: memref<1x32x1xf32, #tpu.memory_space<vmem>>, %arg5: memref<96x32xbf16, #tpu.memory_space<vmem>>, %arg6: memref<96x1xf32, #tpu.memory_space<vmem>>, %arg7: memref<1x32x256xbf16, #tpu.memory_space<vmem>>, %arg8: memref<1x32x256xbf16, #tpu.memory_space<vmem>>, %arg9: memref<1x32x256xbf16, #tpu.memory_space<vmem>>) attributes {dimension_semantics = [#tpu.dimension_semantics<parallel>, #tpu.dimension_semantics<parallel>], iteration_bounds = array<i64: 2, 1>, scalar_prefetch = 0 : i64, scratch_operands = 0 : i64, tpu.core_type = #tpu.core_type<tc>, window_params = [{transform_indices = @transform_0, window_bounds = array<i64: 1, 32, 256>}, {transform_indices = @transform_1, window_bounds = array<i64: 1, 32, 1>}, {transform_indices = @transform_2, window_bounds = array<i64: 1, 32, 1>}, {pipeline_mode = #tpu.pipeline_mode<synchronous>, transform_indices = @transform_3, window_bounds = array<i64: 96, 32>}, {pipeline_mode = #tpu.pipeline_mode<synchronous>, transform_indices = @transform_4, window_bounds = array<i64: 96, 1>}, {transform_indices = @transform_5, window_bounds = array<i64: 1, 32, 256>}, {transform_indices = @transform_6, window_bounds = array<i64: 1, 32, 256>}, {transform_indices = @transform_7, window_bounds = array<i64: 1, 32, 256>}]} {
    %c0 = arith.constant 0 : index
    %c0_0 = arith.constant 0 : index
    %c0_1 = arith.constant 0 : index
    %0 = vector.load %arg2[%c0, %c0_0, %c0_1] : memref<1x32x256xf32, #tpu.memory_space<vmem>>, vector<1x32x256xf32>
    %1 = vector.shape_cast %0 : vector<1x32x256xf32> to vector<32x256xf32>
    %c0_2 = arith.constant 0 : index
    %c0_3 = arith.constant 0 : index
    %c0_4 = arith.constant 0 : index
    %2 = vector.load %arg3[%c0_2, %c0_3, %c0_4] : memref<1x32x1xf32, #tpu.memory_space<vmem>>, vector<1x32x1xf32>
    %3 = vector.shape_cast %2 : vector<1x32x1xf32> to vector<32x1xf32>
    %4 = vector.broadcast %3 : vector<32x1xf32> to vector<32x256xf32>
    %5 = arith.mulf %1, %4 : vector<32x256xf32>
    %c0_5 = arith.constant 0 : index
    %c0_6 = arith.constant 0 : index
    %c0_7 = arith.constant 0 : index
    %6 = vector.load %arg4[%c0_5, %c0_6, %c0_7] : memref<1x32x1xf32, #tpu.memory_space<vmem>>, vector<1x32x1xf32>
    %7 = vector.shape_cast %6 : vector<1x32x1xf32> to vector<32x1xf32>
    %8 = vector.broadcast %7 : vector<32x1xf32> to vector<32x256xf32>
    %9 = arith.addf %5, %8 : vector<32x256xf32>
    %10 = arith.truncf %9 : vector<32x256xf32> to vector<32x256xbf16>
    %c0_8 = arith.constant 0 : index
    %c0_9 = arith.constant 0 : index
    %11 = vector.load %arg5[%c0_8, %c0_9] : memref<96x32xbf16, #tpu.memory_space<vmem>>, vector<96x32xbf16>
    %cst = arith.constant dense<0.000000e+00> : vector<96x256xf32>
    %12 = tpu.matmul %11, %10, %cst {dimension_numbers = #tpu.dot_dimension_numbers<[1], [0], [0], [1], [0, 0, 1, 1], [], []>} : vector<96x32xbf16>, vector<32x256xbf16>, vector<96x256xf32> -> vector<96x256xf32>
    %c0_10 = arith.constant 0 : index
    %c0_11 = arith.constant 0 : index
    %13 = vector.load %arg6[%c0_10, %c0_11] : memref<96x1xf32, #tpu.memory_space<vmem>>, vector<96x1xf32>
    %14 = vector.broadcast %13 : vector<96x1xf32> to vector<96x256xf32>
    %15 = arith.addf %12, %14 : vector<96x256xf32>
    %16 = vector.extract_strided_slice %15 {offsets = [0, 0], sizes = [32, 256], strides = [1, 1]} : vector<96x256xf32> to vector<32x256xf32>
    %cst_12 = arith.constant 0.176776692 : f32
    %17 = vector.broadcast %cst_12 : f32 to vector<32x256xf32>
    %18 = arith.mulf %16, %17 : vector<32x256xf32>
    %19 = arith.truncf %18 : vector<32x256xf32> to vector<32x256xbf16>
    %c0_13 = arith.constant 0 : index
    %c0_14 = arith.constant 0 : index
    %c0_15 = arith.constant 0 : index
    %20 = vector.load %arg7[%c0_13, %c0_14, %c0_15] : memref<1x32x256xbf16, #tpu.memory_space<vmem>>, vector<1x32x256xbf16>
    %21 = vector.shape_cast %20 : vector<1x32x256xbf16> to vector<32x256xbf16>
    %22 = vector.shape_cast %19 : vector<32x256xbf16> to vector<1x32x256xbf16>
    tpu.vector_store %arg7[%c0_13, %c0_14, %c0_15], %22 {strides = array<i32>} : memref<1x32x256xbf16, #tpu.memory_space<vmem>>, vector<1x32x256xbf16>,
    %23 = vector.extract_strided_slice %15 {offsets = [32, 0], sizes = [32, 256], strides = [1, 1]} : vector<96x256xf32> to vector<32x256xf32>
    %24 = arith.truncf %23 : vector<32x256xf32> to vector<32x256xbf16>
    %c0_16 = arith.constant 0 : index
    %c0_17 = arith.constant 0 : index
    %c0_18 = arith.constant 0 : index
    %25 = vector.load %arg8[%c0_16, %c0_17, %c0_18] : memref<1x32x256xbf16, #tpu.memory_space<vmem>>, vector<1x32x256xbf16>
    %26 = vector.shape_cast %25 : vector<1x32x256xbf16> to vector<32x256xbf16>
    %27 = vector.shape_cast %24 : vector<32x256xbf16> to vector<1x32x256xbf16>
    tpu.vector_store %arg8[%c0_16, %c0_17, %c0_18], %27 {strides = array<i32>} : memref<1x32x256xbf16, #tpu.memory_space<vmem>>, vector<1x32x256xbf16>,
    %28 = vector.extract_strided_slice %15 {offsets = [64, 0], sizes = [32, 256], strides = [1, 1]} : vector<96x256xf32> to vector<32x256xf32>
    %29 = arith.truncf %28 : vector<32x256xf32> to vector<32x256xbf16>
    %c0_19 = arith.constant 0 : index
    %c0_20 = arith.constant 0 : index
    %c0_21 = arith.constant 0 : index
    %30 = vector.load %arg9[%c0_19, %c0_20, %c0_21] : memref<1x32x256xbf16, #tpu.memory_space<vmem>>, vector<1x32x256xbf16>
    %31 = vector.shape_cast %30 : vector<1x32x256xbf16> to vector<32x256xbf16>
    %32 = vector.shape_cast %29 : vector<32x256xbf16> to vector<1x32x256xbf16>
    tpu.vector_store %arg9[%c0_19, %c0_20, %c0_21], %32 {strides = array<i32>} : memref<1x32x256xbf16, #tpu.memory_space<vmem>>, vector<1x32x256xbf16>,
    return
  }
  func.func @transform_0(%arg0: i32, %arg1: i32) -> (i32, i32, i32) {
    %c0_i32 = arith.constant 0 : i32
    %c0_i32_0 = arith.constant 0 : i32
    return %arg0, %c0_i32, %arg1 : i32, i32, i32
  }
  func.func @transform_1(%arg0: i32, %arg1: i32) -> (i32, i32, i32) {
    %c0_i32 = arith.constant 0 : i32
    %c0_i32_0 = arith.constant 0 : i32
    %c0_i32_1 = arith.constant 0 : i32
    return %arg0, %c0_i32, %c0_i32_0 : i32, i32, i32
  }
  func.func @transform_2(%arg0: i32, %arg1: i32) -> (i32, i32, i32) {
    %c0_i32 = arith.constant 0 : i32
    %c0_i32_0 = arith.constant 0 : i32
    %c0_i32_1 = arith.constant 0 : i32
    return %arg0, %c0_i32, %c0_i32_0 : i32, i32, i32
  }
  func.func @transform_3(%arg0: i32, %arg1: i32) -> (i32, i32) {
    %c0_i32 = arith.constant 0 : i32
    %c0_i32_0 = arith.constant 0 : i32
    %c0_i32_1 = arith.constant 0 : i32
    return %c0_i32, %c0_i32_0 : i32, i32
  }
  func.func @transform_4(%arg0: i32, %arg1: i32) -> (i32, i32) {
    %c0_i32 = arith.constant 0 : i32
    %c0_i32_0 = arith.constant 0 : i32
    %c0_i32_1 = arith.constant 0 : i32
    return %c0_i32, %c0_i32_0 : i32, i32
  }
  func.func @transform_5(%arg0: i32, %arg1: i32) -> (i32, i32, i32) {
    %c0_i32 = arith.constant 0 : i32
    %c0_i32_0 = arith.constant 0 : i32
    return %arg0, %c0_i32, %arg1 : i32, i32, i32
  }
  func.func @transform_6(%arg0: i32, %arg1: i32) -> (i32, i32, i32) {
    %c0_i32 = arith.constant 0 : i32
    %c0_i32_0 = arith.constant 0 : i32
    return %arg0, %c0_i32, %arg1 : i32, i32, i32
  }
  func.func @transform_7(%arg0: i32, %arg1: i32) -> (i32, i32, i32) {
    %c0_i32 = arith.constant 0 : i32
    %c0_i32_0 = arith.constant 0 : i32
    return %arg0, %c0_i32, %arg1 : i32, i32, i32
  }
}

</mosaic_0001>

<llo_original>
// kernel: tpu_custom_call.1
$region0: #{tpu_custom_call.1}
  #allocation0 [shape = 'u32[]', space=smem, size = 0x4, offset = 0x4, fixed_abs, tag = 'smem constant byte address 0x4 - core index']
  #allocation1 [shape = 'u32[144,128]{1,0:T(1,128)}', space=vmem, size = 0x12000, scoped, tag = 'internal scratch']
  %s0 = inlined_call_operand.vmem [shape: f32[2,32,256], index: 0, kind: input, shape index: {}]
  %s1 = inlined_call_operand.vmem [shape: f32[2,32,1], index: 1, kind: input, shape index: {}]
  %s2 = inlined_call_operand.vmem [shape: f32[2,32,1], index: 2, kind: input, shape index: {}]
  %s3 = inlined_call_operand.vmem [shape: bf16[96,32], index: 3, kind: input, shape index: {}]
  %s4 = inlined_call_operand.vmem [shape: f32[96,1], index: 4, kind: input, shape index: {}]
  %s5 = inlined_call_operand.hbm [shape: bf16[2,32,256], index: 5, kind: output, shape index: {0}]
  %s6 = inlined_call_operand.hbm [shape: bf16[2,32,256], index: 6, kind: output, shape index: {1}]
  %s7 = inlined_call_operand.hbm [shape: bf16[2,32,256], index: 7, kind: output, shape index: {2}]
  %8 = xla_tuple %s5, %s6, %s7
  %s9 = sld [smem:[#allocation0]]
  $region69: #{tpu_custom_call.1} parent=0
    _
  %s11 = ssub.s32 1, %s9
  %s12 = scalar_select 0, %s11, %s9
  $region1: #{tpu_custom_call.1} parent=0
    #allocation2 [shape = 'u8[32768]{0}', space=vmem, size = 0x8000, scoped, tag = 'output window, operand 0']
    #allocation3 [shape = 's32[2]{0}', space=sflag, size = 0x8, scoped, tag = 'scoped memory for tpu_custom_call.1']
    #allocation4 [shape = 'u8[32768]{0}', space=vmem, size = 0x8000, scoped, tag = 'output window, operand 1']
    #allocation5 [shape = 's32[2]{0}', space=sflag, size = 0x8, scoped, tag = 'scoped memory for tpu_custom_call.1']
    #allocation6 [shape = 'u8[32768]{0}', space=vmem, size = 0x8000, scoped, tag = 'output window, operand 2']
    %13 = vsyncpa [#allocation3], 0
    %s14 = scalar_lea.sflag [#allocation3], 1
    %15 = vsyncpa %s14, 0
    %16 = vsyncpa [#allocation5], 0
    %s17 = scalar_lea.sflag [#allocation5], 1
    %18 = vsyncpa %s17, 0
    loop: start=0, step=1, limit=4
    $region2: #{tpu_custom_call.1} parent=1 // loop_pre_header
      _
    $region3: #{tpu_custom_call.1} parent=1 // loop_header
      %s20 = sphi 0, %s24
      %p21 = scmp.ge.s32.totalorder %s20, 4
      %s27 = sphi 0, %s39
      %s28 = sphi 0, %s35
      %s29 = sphi 0, %s27
      %s30 = sphi 0, %s28
      %s31 = sphi 0, %s29
      %s32 = sphi 0, %s30
      %s44 = sphi 0, %s46
      %s47 = sphi 0, %s44
      %s48 = sphi 0, %s47
      %s64 = sphi 0, %s48
      %s70 = sphi 0, %s72
      %s73 = sphi 0, %s70
      %s74 = sphi 0, %s73
      %s90 = sphi 0, %s74
      %s96 = sphi 0, %s98
      %s99 = sphi 0, %s96
      %s100 = sphi 0, %s99
      %s116 = sphi 0, %s100
      %s120 = sphi 0, %s120
      %s122 = sphi 0, %s120
      %s123 = sphi 0, %s122
      %s137 = sphi 0, %s123
      %s141 = sphi 0, %s141
      %s143 = sphi 0, %s141
      %s144 = sphi 0, %s143
      %s158 = sphi 0, %s144
      %s166 = sphi 0, %s168
      %s169 = sphi 0, %s166
      %s170 = sphi 0, %s169
      %s186 = sphi 0, %s170
      %s194 = sphi 0, %s196
      %s197 = sphi 0, %s194
      %s198 = sphi 0, %s197
      %s214 = sphi 0, %s198
      %s222 = sphi 0, %s224
      %s225 = sphi 0, %s222
      %s226 = sphi 0, %s225
      %s242 = sphi 0, %s226
    $region4: #{tpu_custom_call.1} parent=1 // loop_header_branch
      %23 = sbr.rel (%p21) target = $region8
    $region5: #{tpu_custom_call.1} parent=1 // loop_body
      %s25 = ssub.s32 %s20, 1
      %s26 = ssub.s32 %s20, 2
      %s33 = sadd.s32 1, %s28
      %p34 = scmp.ge.s32.totalorder %s33, 1
      %s35 = scalar_select %p34, 0, %s33
      %s36 = sadd.s32 1, %s27
      %s37 = scalar_select %p34, %s36, %s27
      %p38 = scmp.ge.s32.totalorder %s37, 2
      %s39 = scalar_select %p38, 0, %s37
      %s40 = ssub.s32 %s27, %s39
      %s41 = ssub.s32 %s28, %s35
      %s42 = sor.u32 %s40, %s41
      %p43 = scmp.eq.s32.totalorder %s42, 0
      %s45 = sadd.s32 %s44, 1
      %s46 = scalar_select %p43, %s44, %s45
      %p49 = pneg %p43
      %p50 = scmp.eq.s32.totalorder %s20, 1
      %p51 = por %p49, %p50
      %p52 = scmp.ne.s32.totalorder %s44, %s47
      %p53 = scmp.eq.s32.totalorder %s20, 0
      %p54 = por %p52, %p53
      %p55 = scmp.ne.s32.totalorder %s44, %s47
      %p56 = scmp.eq.s32.totalorder %s25, 1
      %p57 = por %p55, %p56
      %p58 = scmp.ne.s32.totalorder %s47, %s48
      %p59 = scmp.eq.s32.totalorder %s25, 0
      %p60 = por %p58, %p59
      %p61 = scmp.ne.s32.totalorder %s47, %s48
      %p62 = scmp.eq.s32.totalorder %s26, 1
      %p63 = por %p61, %p62
      %p65 = scmp.ne.s32.totalorder %s48, %s64
      %p66 = scmp.eq.s32.totalorder %s26, 0
      %p67 = por %p65, %p66
      %s68 = ssub.s32 %s27, %s39
      %p69 = scmp.eq.s32.totalorder %s68, 0
      %s71 = sadd.s32 %s70, 1
      %s72 = scalar_select %p69, %s70, %s71
      %p75 = pneg %p69
      %p76 = scmp.eq.s32.totalorder %s20, 1
      %p77 = por %p75, %p76
      %p78 = scmp.ne.s32.totalorder %s70, %s73
      %p79 = scmp.eq.s32.totalorder %s20, 0
      %p80 = por %p78, %p79
      %p81 = scmp.ne.s32.totalorder %s70, %s73
      %p82 = scmp.eq.s32.totalorder %s25, 1
      %p83 = por %p81, %p82
      %p84 = scmp.ne.s32.totalorder %s73, %s74
      %p85 = scmp.eq.s32.totalorder %s25, 0
      %p86 = por %p84, %p85
      %p87 = scmp.ne.s32.totalorder %s73, %s74
      %p88 = scmp.eq.s32.totalorder %s26, 1
      %p89 = por %p87, %p88
      %p91 = scmp.ne.s32.totalorder %s74, %s90
      %p92 = scmp.eq.s32.totalorder %s26, 0
      %p93 = por %p91, %p92
      %s94 = ssub.s32 %s27, %s39
      %p95 = scmp.eq.s32.totalorder %s94, 0
      %s97 = sadd.s32 %s96, 1
      %s98 = scalar_select %p95, %s96, %s97
      %p101 = pneg %p95
      %p102 = scmp.eq.s32.totalorder %s20, 1
      %p103 = por %p101, %p102
      %p104 = scmp.ne.s32.totalorder %s96, %s99
      %p105 = scmp.eq.s32.totalorder %s20, 0
      %p106 = por %p104, %p105
      %p107 = scmp.ne.s32.totalorder %s96, %s99
      %p108 = scmp.eq.s32.totalorder %s25, 1
      %p109 = por %p107, %p108
      %p110 = scmp.ne.s32.totalorder %s99, %s100
      %p111 = scmp.eq.s32.totalorder %s25, 0
      %p112 = por %p110, %p111
      %p113 = scmp.ne.s32.totalorder %s99, %s100
      %p114 = scmp.eq.s32.totalorder %s26, 1
      %p115 = por %p113, %p114
      %p117 = scmp.ne.s32.totalorder %s100, %s116
      %p118 = scmp.eq.s32.totalorder %s26, 0
      %p119 = por %p117, %p118
      %s121 = sadd.s32 %s120, 1
      %p124 = scmp.eq.s32.totalorder %s20, 1
      %p125 = scmp.ne.s32.totalorder %s120, %s122
      %p126 = scmp.eq.s32.totalorder %s20, 0
      %p127 = por %p125, %p126
      %p128 = scmp.ne.s32.totalorder %s120, %s122
      %p129 = scmp.eq.s32.totalorder %s25, 1
      %p130 = por %p128, %p129
      %p131 = scmp.ne.s32.totalorder %s122, %s123
      %p132 = scmp.eq.s32.totalorder %s25, 0
      %p133 = por %p131, %p132
      %p134 = scmp.ne.s32.totalorder %s122, %s123
      %p135 = scmp.eq.s32.totalorder %s26, 1
      %p136 = por %p134, %p135
      %p138 = scmp.ne.s32.totalorder %s123, %s137
      %p139 = scmp.eq.s32.totalorder %s26, 0
      %p140 = por %p138, %p139
      %s142 = sadd.s32 %s141, 1
      %p145 = scmp.eq.s32.totalorder %s20, 1
      %p146 = scmp.ne.s32.totalorder %s141, %s143
      %p147 = scmp.eq.s32.totalorder %s20, 0
      %p148 = por %p146, %p147
      %p149 = scmp.ne.s32.totalorder %s141, %s143
      %p150 = scmp.eq.s32.totalorder %s25, 1
      %p151 = por %p149, %p150
      %p152 = scmp.ne.s32.totalorder %s143, %s144
      %p153 = scmp.eq.s32.totalorder %s25, 0
      %p154 = por %p152, %p153
      %p155 = scmp.ne.s32.totalorder %s143, %s144
      %p156 = scmp.eq.s32.totalorder %s26, 1
      %p157 = por %p155, %p156
      %p159 = scmp.ne.s32.totalorder %s144, %s158
      %p160 = scmp.eq.s32.totalorder %s26, 0
      %p161 = por %p159, %p160
      %s162 = ssub.s32 %s27, %s39
      %s163 = ssub.s32 %s28, %s35
      %s164 = sor.u32 %s162, %s163
      %p165 = scmp.eq.s32.totalorder %s164, 0
      %s167 = sadd.s32 %s166, 1
      %s168 = scalar_select %p165, %s166, %s167
      %p171 = pneg %p165
      %p172 = scmp.eq.s32.totalorder %s20, 1
      %p173 = por %p171, %p172
      %p174 = scmp.ne.s32.totalorder %s166, %s169
      %p175 = scmp.eq.s32.totalorder %s20, 0
      %p176 = por %p174, %p175
      %p177 = scmp.ne.s32.totalorder %s166, %s169
      %p178 = scmp.eq.s32.totalorder %s25, 1
      %p179 = por %p177, %p178
      %p180 = scmp.ne.s32.totalorder %s169, %s170
      %p181 = scmp.eq.s32.totalorder %s25, 0
      %p182 = por %p180, %p181
      %p183 = scmp.ne.s32.totalorder %s169, %s170
      %p184 = scmp.eq.s32.totalorder %s26, 1
      %p185 = por %p183, %p184
      %p187 = scmp.ne.s32.totalorder %s170, %s186
      %p188 = scmp.eq.s32.totalorder %s26, 0
      %p189 = por %p187, %p188
      %s190 = ssub.s32 %s27, %s39
      %s191 = ssub.s32 %s28, %s35
      %s192 = sor.u32 %s190, %s191
      %p193 = scmp.eq.s32.totalorder %s192, 0
      %s195 = sadd.s32 %s194, 1
      %s196 = scalar_select %p193, %s194, %s195
      %p199 = pneg %p193
      %p200 = scmp.eq.s32.totalorder %s20, 1
      %p201 = por %p199, %p200
      %p202 = scmp.ne.s32.totalorder %s194, %s197
      %p203 = scmp.eq.s32.totalorder %s20, 0
      %p204 = por %p202, %p203
      %p205 = scmp.ne.s32.totalorder %s194, %s197
      %p206 = scmp.eq.s32.totalorder %s25, 1
      %p207 = por %p205, %p206
      %p208 = scmp.ne.s32.totalorder %s197, %s198
      %p209 = scmp.eq.s32.totalorder %s25, 0
      %p210 = por %p208, %p209
      %p211 = scmp.ne.s32.totalorder %s197, %s198
      %p212 = scmp.eq.s32.totalorder %s26, 1
      %p213 = por %p211, %p212
      %p215 = scmp.ne.s32.totalorder %s198, %s214
      %p216 = scmp.eq.s32.totalorder %s26, 0
      %p217 = por %p215, %p216
      %s218 = ssub.s32 %s27, %s39
      %s219 = ssub.s32 %s28, %s35
      %s220 = sor.u32 %s218, %s219
      %p221 = scmp.eq.s32.totalorder %s220, 0
      %s223 = sadd.s32 %s222, 1
      %s224 = scalar_select %p221, %s222, %s223
      %p227 = pneg %p221
      %p228 = scmp.eq.s32.totalorder %s20, 1
      %p229 = por %p227, %p228
      %p230 = scmp.ne.s32.totalorder %s222, %s225
      %p231 = scmp.eq.s32.totalorder %s20, 0
      %p232 = por %p230, %p231
      %p233 = scmp.ne.s32.totalorder %s222, %s225
      %p234 = scmp.eq.s32.totalorder %s25, 1
      %p235 = por %p233, %p234
      %p236 = scmp.ne.s32.totalorder %s225, %s226
      %p237 = scmp.eq.s32.totalorder %s25, 0
      %p238 = por %p236, %p237
      %p239 = scmp.ne.s32.totalorder %s225, %s226
      %p240 = scmp.eq.s32.totalorder %s26, 1
      %p241 = por %p239, %p240
      %p243 = scmp.ne.s32.totalorder %s226, %s242
      %p244 = scmp.eq.s32.totalorder %s26, 0
      %p245 = por %p243, %p244
      %p246 = scmp.le.s32.totalorder 1, %s20
      %p247 = scmp.lt.s32.totalorder %s20, 3
      %p248 = pnand %p246, %p247
      %p249 = pneg %p248
      // Predicated region
      $region9: #{tpu_custom_call.1} parent=5 // pred_check
        _
      $region10: #{tpu_custom_call.1} parent=5 // pred_check_branch
        %251 = sbr.rel (%p248) target = $region12
      $region11: #{tpu_custom_call.1} parent=5 // pred_region
        %s252 = ssub.s32 %s20, 1
        // Predicated region
        $region13: #{tpu_custom_call.1} parent=11 // pred_check
          %p253 = pneg %p133
        $region14: #{tpu_custom_call.1} parent=11 // pred_check_branch
          %255 = sbr.rel (%p253) target = $region16
        $region15: #{tpu_custom_call.1} parent=11 // pred_region
          _
        $region16: #{tpu_custom_call.1} parent=11 // pred_fallthru
          _
        // Predicated region
        $region17: #{tpu_custom_call.1} parent=11 // pred_check
          %p256 = pneg %p154
        $region18: #{tpu_custom_call.1} parent=11 // pred_check_branch
          %258 = sbr.rel (%p256) target = $region20
        $region19: #{tpu_custom_call.1} parent=11 // pred_region
          _
        $region20: #{tpu_custom_call.1} parent=11 // pred_fallthru
          _
      $region12: #{tpu_custom_call.1} parent=5 // pred_fallthru
        _
      %p259 = scmp.lt.s32.totalorder %s20, 2
      // Predicated region
      $region21: #{tpu_custom_call.1} parent=5 // pred_check
        %p260 = pneg %p259
      $region22: #{tpu_custom_call.1} parent=5 // pred_check_branch
        %262 = sbr.rel (%p260) target = $region24
      $region23: #{tpu_custom_call.1} parent=5 // pred_region
        // Predicated region
        $region25: #{tpu_custom_call.1} parent=23 // pred_check
          %p263 = pneg %p54
        $region26: #{tpu_custom_call.1} parent=23 // pred_check_branch
          %265 = sbr.rel (%p263) target = $region28
        $region27: #{tpu_custom_call.1} parent=23 // pred_region
          %s266 = smul.u32 2, %s28
          %p267 = scmp.lt.s32.totalorder %s27, 1
          %s268 = scalar_select %p267, %s27, 1
          %p269 = scmp.lt.s32.totalorder %s266, 1
          %s270 = scalar_select %p269, %s266, 1
          %s271 = smul.addr %s268, 8
          %s272 = sadd.s32 %s270, %s271
          %s273 = smul.addr %s272, 8
          %s274 = scalar_lea.vmem %s0, %s273
          %s275 = smul.u32 2, %s28
        $region28: #{tpu_custom_call.1} parent=23 // pred_fallthru
          _
        // Predicated region
        $region29: #{tpu_custom_call.1} parent=23 // pred_check
          %p276 = pneg %p80
        $region30: #{tpu_custom_call.1} parent=23 // pred_check_branch
          %278 = sbr.rel (%p276) target = $region32
        $region31: #{tpu_custom_call.1} parent=23 // pred_region
          %p279 = scmp.lt.s32.totalorder %s27, 1
          %s280 = scalar_select %p279, %s27, 1
          %s281 = smul.addr %s280, 4
          %s282 = smul.addr %s281, 8
          %s283 = scalar_lea.vmem %s1, %s282
        $region32: #{tpu_custom_call.1} parent=23 // pred_fallthru
          _
        // Predicated region
        $region33: #{tpu_custom_call.1} parent=23 // pred_check
          %p284 = pneg %p106
        $region34: #{tpu_custom_call.1} parent=23 // pred_check_branch
          %286 = sbr.rel (%p284) target = $region36
        $region35: #{tpu_custom_call.1} parent=23 // pred_region
          %p287 = scmp.lt.s32.totalorder %s27, 1
          %s288 = scalar_select %p287, %s27, 1
          %s289 = smul.addr %s288, 4
          %s290 = smul.addr %s289, 8
          %s291 = scalar_lea.vmem %s2, %s290
        $region36: #{tpu_custom_call.1} parent=23 // pred_fallthru
          _
      $region24: #{tpu_custom_call.1} parent=5 // pred_fallthru
        _
      %p292 = scmp.le.s32.totalorder 1, %s20
      %p293 = scmp.lt.s32.totalorder %s20, 3
      %p294 = pnand %p292, %p293
      %p295 = pneg %p294
      // Predicated region
      $region37: #{tpu_custom_call.1} parent=5 // pred_check
        _
      $region38: #{tpu_custom_call.1} parent=5 // pred_check_branch
        %297 = sbr.rel (%p294) target = $region40
      $region39: #{tpu_custom_call.1} parent=5 // pred_region
        %s298 = ssub.s32 %s20, 1
        %s299 = smul.u32 2, %s30
        %p300 = scmp.lt.s32.totalorder %s29, 1
        %s301 = scalar_select %p300, %s29, 1
        %p302 = scmp.lt.s32.totalorder %s299, 1
        %s303 = scalar_select %p302, %s299, 1
        %s304 = smul.addr %s301, 8
        %s305 = sadd.s32 %s303, %s304
        %s306 = smul.addr %s305, 8
        %s307 = scalar_lea.vmem %s0, %s306
        %p308 = pneg %p60
        %p309 = pneg %p57
        %p310 = scmp.lt.s32.totalorder %s29, 1
        %s311 = scalar_select %p310, %s29, 1
        %s312 = smul.addr %s311, 4
        %s313 = smul.addr %s312, 8
        %s314 = scalar_lea.vmem %s1, %s313
        %p315 = pneg %p86
        %p316 = pneg %p83
        %p317 = scmp.lt.s32.totalorder %s29, 1
        %s318 = scalar_select %p317, %s29, 1
        %s319 = smul.addr %s318, 4
        %s320 = smul.addr %s319, 8
        %s321 = scalar_lea.vmem %s2, %s320
        %p322 = pneg %p112
        %p323 = pneg %p109
        %p324 = pneg %p133
        %p325 = pneg %p130
        %p326 = pneg %p154
        %p327 = pneg %p151
        %p328 = pneg %p182
        %p329 = pneg %p179
        %s330 = sand.u32 %s169, 1
        %s331 = scalar_lea.sflag [#allocation3], %s330
        %s332 = sand.u32 %s169, 1
        %s333 = smul.addr %s332, 32
        %s334 = scalar_lea.vmem [#allocation2], %s333
        %p335 = pneg %p210
        %p336 = pneg %p207
        %s337 = sand.u32 %s25, 1
        %s338 = scalar_lea.sflag [#allocation5], %s337
        %s339 = sand.u32 %s197, 1
        %s340 = smul.addr %s339, 32
        %s341 = scalar_lea.vmem [#allocation4], %s340
        %p342 = pneg %p238
        %p343 = pneg %p235
        %s344 = sand.u32 %s25, 1
        %s345 = scalar_lea.sflag [#allocation5], %s344
        %s346 = sand.u32 %s225, 1
        %s347 = smul.addr %s346, 32
        %s348 = scalar_lea.vmem [#allocation6], %s347
        %s349 = smul.u32 2, %s30
        %p350 = scmp.lt.s32.totalorder %s29, 1
        %s351 = scalar_select %p350, %s29, 1
        %p352 = scmp.lt.s32.totalorder %s349, 1
        %s353 = scalar_select %p352, %s349, 1
        %s354 = smul.addr %s351, 8
        %s355 = sadd.s32 %s353, %s354
        %s356 = smul.addr %s355, 8
        %s357 = scalar_lea.vmem %s0, %s356
        %s358 = smul.u32 2, %s30
        %p359 = scmp.lt.s32.totalorder %s29, 1
        %s360 = scalar_select %p359, %s29, 1
        %s361 = smul.addr %s360, 4
        %s362 = smul.addr %s361, 8
        %s363 = scalar_lea.vmem %s1, %s362
        %p364 = scmp.lt.s32.totalorder %s29, 1
        %s365 = scalar_select %p364, %s29, 1
        %s366 = smul.addr %s365, 4
        %s367 = smul.addr %s366, 8
        %s368 = scalar_lea.vmem %s2, %s367
        %s369 = smul.u32 2, %s30
        %s370 = smul.u32 2, %s30
        %s371 = smul.u32 2, %s30
        %v373 = vld [vmem:[%s357] sm:$0xff]
        %v374 = vld [vmem:[%s357 + $0x8] sm:$0xff]
        %v375 = vld [vmem:[%s357 + $0x10] sm:$0xff]
        %v376 = vld [vmem:[%s357 + $0x18] sm:$0xff]
        %v377 = vld [vmem:[%s357 + $0x20] sm:$0xff]
        %v378 = vld [vmem:[%s357 + $0x28] sm:$0xff]
        %v379 = vld [vmem:[%s357 + $0x30] sm:$0xff]
        %v380 = vld [vmem:[%s357 + $0x38] sm:$0xff]
        %v381 = vld [vmem:[%s363] sm:$0xff]
        %v382 = vld [vmem:[%s363 + $0x8] sm:$0xff]
        %v383 = vld [vmem:[%s363 + $0x10] sm:$0xff]
        %v384 = vld [vmem:[%s363 + $0x18] sm:$0xff]
        %386 = vset.pattern.permute.xlu0 0
        %387 = vperm.xlu0 %386, %v381
        %v388 = vpop.permute.xlu0 %387
        %391 = vset.pattern.permute.xlu0 0
        %392 = vperm.xlu0 %391, %v382
        %v393 = vpop.permute.xlu0 %392
        %396 = vset.pattern.permute.xlu0 0
        %397 = vperm.xlu0 %396, %v383
        %v398 = vpop.permute.xlu0 %397
        %401 = vset.pattern.permute.xlu0 0
        %402 = vperm.xlu0 %401, %v384
        %v403 = vpop.permute.xlu0 %402
        %v405 = vmul.f32 %v373, %v388
        %v406 = vmul.f32 %v374, %v388
        %v407 = vmul.f32 %v375, %v393
        %v408 = vmul.f32 %v376, %v393
        %v409 = vmul.f32 %v377, %v398
        %v410 = vmul.f32 %v378, %v398
        %v411 = vmul.f32 %v379, %v403
        %v412 = vmul.f32 %v380, %v403
        %v413 = vld [vmem:[%s368] sm:$0xff]
        %v414 = vld [vmem:[%s368 + $0x8] sm:$0xff]
        %v415 = vld [vmem:[%s368 + $0x10] sm:$0xff]
        %v416 = vld [vmem:[%s368 + $0x18] sm:$0xff]
        %418 = vset.pattern.permute.xlu0 0
        %419 = vperm.xlu0 %418, %v413
        %v420 = vpop.permute.xlu0 %419
        %423 = vset.pattern.permute.xlu0 0
        %424 = vperm.xlu0 %423, %v414
        %v425 = vpop.permute.xlu0 %424
        %428 = vset.pattern.permute.xlu0 0
        %429 = vperm.xlu0 %428, %v415
        %v430 = vpop.permute.xlu0 %429
        %433 = vset.pattern.permute.xlu0 0
        %434 = vperm.xlu0 %433, %v416
        %v435 = vpop.permute.xlu0 %434
        %v437 = vadd.f32 %v405, %v420
        %v438 = vadd.f32 %v406, %v420
        %v439 = vadd.f32 %v407, %v425
        %v440 = vadd.f32 %v408, %v425
        %v441 = vadd.f32 %v409, %v430
        %v442 = vadd.f32 %v410, %v430
        %v443 = vadd.f32 %v411, %v435
        %v444 = vadd.f32 %v412, %v435
        %v445 = vpack.c.bf16 %v439, %v437
        %v446 = vpack.c.bf16 %v440, %v438
        %v447 = vpack.c.bf16 %v443, %v441
        %v448 = vpack.c.bf16 %v444, %v442
        %v449 = vld [vmem:[%s3] sm:$0xf]
        %v450 = vld [vmem:[%s3 + $0x4] sm:$0xf]
        %v451 = vld [vmem:[%s3 + $0x8] sm:$0xf]
        %v452 = vld [vmem:[%s3 + $0xc] sm:$0xf]
        %v453 = vld [vmem:[%s3 + $0x10] sm:$0xf]
        %v454 = vld [vmem:[%s3 + $0x14] sm:$0xf]
        %v455 = vld [vmem:[%s3 + $0x18] sm:$0xf]
        %v456 = vld [vmem:[%s3 + $0x1c] sm:$0xf]
        %v457 = vld [vmem:[%s3 + $0x20] sm:$0xf]
        %v458 = vld [vmem:[%s3 + $0x24] sm:$0xf]
        %v459 = vld [vmem:[%s3 + $0x28] sm:$0xf]
        %v460 = vld [vmem:[%s3 + $0x2c] sm:$0xf]
        %v461 = vld [vmem:[%s4] sm:$0xff]
        %v462 = vld [vmem:[%s4 + $0x8] sm:$0xff]
        %v463 = vld [vmem:[%s4 + $0x10] sm:$0xff]
        %v464 = vld [vmem:[%s4 + $0x18] sm:$0xff]
        %v465 = vld [vmem:[%s4 + $0x20] sm:$0xff]
        %v466 = vld [vmem:[%s4 + $0x28] sm:$0xff]
        %v467 = vld [vmem:[%s4 + $0x30] sm:$0xff]
        %v468 = vld [vmem:[%s4 + $0x38] sm:$0xff]
        %v469 = vld [vmem:[%s4 + $0x40] sm:$0xff]
        %v470 = vld [vmem:[%s4 + $0x48] sm:$0xff]
        %v471 = vld [vmem:[%s4 + $0x50] sm:$0xff]
        %v472 = vld [vmem:[%s4 + $0x58] sm:$0xff]
        %474 = vset.pattern.permute.xlu0 0
        %475 = vperm.xlu0 %474, %v461
        %v476 = vpop.permute.xlu0 %475
        %479 = vset.pattern.permute.xlu0 0
        %480 = vperm.xlu0 %479, %v462
        %v481 = vpop.permute.xlu0 %480
        %484 = vset.pattern.permute.xlu0 0
        %485 = vperm.xlu0 %484, %v463
        %v486 = vpop.permute.xlu0 %485
        %489 = vset.pattern.permute.xlu0 0
        %490 = vperm.xlu0 %489, %v464
        %v491 = vpop.permute.xlu0 %490
        %494 = vset.pattern.permute.xlu0 0
        %495 = vperm.xlu0 %494, %v465
        %v496 = vpop.permute.xlu0 %495
        %499 = vset.pattern.permute.xlu0 0
        %500 = vperm.xlu0 %499, %v466
        %v501 = vpop.permute.xlu0 %500
        %504 = vset.pattern.permute.xlu0 0
        %505 = vperm.xlu0 %504, %v467
        %v506 = vpop.permute.xlu0 %505
        %509 = vset.pattern.permute.xlu0 0
        %510 = vperm.xlu0 %509, %v468
        %v511 = vpop.permute.xlu0 %510
        %514 = vset.pattern.permute.xlu0 0
        %515 = vperm.xlu0 %514, %v469
        %v516 = vpop.permute.xlu0 %515
        %519 = vset.pattern.permute.xlu0 0
        %520 = vperm.xlu0 %519, %v470
        %v521 = vpop.permute.xlu0 %520
        %524 = vset.pattern.permute.xlu0 0
        %525 = vperm.xlu0 %524, %v471
        %v526 = vpop.permute.xlu0 %525
        %529 = vset.pattern.permute.xlu0 0
        %530 = vperm.xlu0 %529, %v472
        %v531 = vpop.permute.xlu0 %530
        %v545 = vunpack.c.l.b16 %v449
        %v546 = vunpack.c.l.b16 %v450
        %v547 = vunpack.c.l.b16 %v451
        %v548 = vunpack.c.l.b16 %v452
        %v549 = vunpack.c.l.b16 %v453
        %v550 = vunpack.c.l.b16 %v454
        %v551 = vunpack.c.l.b16 %v455
        %v552 = vunpack.c.l.b16 %v456
        %v553 = vunpack.c.l.b16 %v457
        %v554 = vunpack.c.l.b16 %v458
        %v555 = vunpack.c.l.b16 %v459
        %v556 = vunpack.c.l.b16 %v460
        %v557 = vpack.c.b16 %v546, %v545
        %v558 = vpack.c.b16 %v548, %v547
        %v559 = vpack.c.b16 %v550, %v549
        %v560 = vpack.c.b16 %v552, %v551
        %v561 = vpack.c.b16 %v554, %v553
        %v562 = vpack.c.b16 %v556, %v555
        %vm563 = vcmask 261120
        %v565 = vsel %vm563, %v557, 0
        %v568 = vsel %vm563, %v558, 0
        %v571 = vsel %vm563, %v559, 0
        %v574 = vsel %vm563, %v560, 0
        %v577 = vsel %vm563, %v561, 0
        %v580 = vsel %vm563, %v562, 0
        %582 = vmatprep.subr.bf16.mxu0 %v446
        %583 = vmatpush1.bf16.msra.mxu0 %v445
        %584 = vmatprep.subr.bf16.mxu0 %v448
        %585 = vmatpush1.bf16.msra.mxu0 %v447
        %586 = vmatprep.subr.bf16.mxu0 0
        %587 = vmatpush1.bf16.msra.mxu0 0
        %588 = vmatprep.subr.bf16.mxu0 0
        %589 = vmatpush1.bf16.msra.mxu0 0
        %590 = vmatprep.subr.bf16.mxu0 0
        %591 = vmatpush1.bf16.msra.mxu0 0
        %592 = vmatprep.subr.bf16.mxu0 0
        %593 = vmatpush1.bf16.msra.mxu0 0
        %594 = vmatprep.subr.bf16.mxu0 0
        %595 = vmatpush1.bf16.msra.mxu0 0
        %596 = vmatprep.subr.bf16.mxu0 0
        %597 = vmatpush1.bf16.msra.mxu0 0
        %598 = vmatprep.subr.bf16.mxu0 0
        %599 = vmatpush1.bf16.msra.mxu0 0
        %600 = vmatprep.subr.bf16.mxu0 0
        %601 = vmatpush1.bf16.msra.mxu0 0
        %602 = vmatprep.subr.bf16.mxu0 0
        %603 = vmatpush1.bf16.msra.mxu0 0
        %604 = vmatprep.subr.bf16.mxu0 0
        %605 = vmatpush1.bf16.msra.mxu0 0
        %606 = vmatprep.subr.bf16.mxu0 0
        %607 = vmatpush1.bf16.msra.mxu0 0
        %608 = vmatprep.subr.bf16.mxu0 0
        %609 = vmatpush1.bf16.msra.mxu0 0
        %610 = vmatprep.subr.bf16.mxu0 0
        %611 = vmatpush1.bf16.msra.mxu0 0
        %612 = vmatprep.subr.bf16.mxu0 0
        %613 = vmatpush1.bf16.msra.mxu0 0
        %614 = vmatprep.mubr.bf16.mxu0 0
        %615 = vmatmul.mubr.bf16.gmra.mrb[0].mxu0 %v565
        %v616 = vpop.f32.mrb[0].mxu0
        %v617 = vadd.f32 %v476, %v616
        %v618 = vpop.f32.mrb[0].mxu0
        %v619 = vadd.f32 %v476, %v618
        %v620 = vpop.f32.mrb[0].mxu0
        %v621 = vadd.f32 %v481, %v620
        %v622 = vpop.f32.mrb[0].mxu0
        %v623 = vadd.f32 %v481, %v622
        %624 = vmatprep.mubr.bf16.mxu0 0
        %625 = vmatmul.mubr.bf16.gmra.mrb[0].mxu0 %v568
        %v626 = vpop.f32.mrb[0].mxu0
        %v627 = vadd.f32 %v486, %v626
        %v628 = vpop.f32.mrb[0].mxu0
        %v629 = vadd.f32 %v486, %v628
        %v630 = vpop.f32.mrb[0].mxu0
        %v631 = vadd.f32 %v491, %v630
        %v632 = vpop.f32.mrb[0].mxu0
        %v633 = vadd.f32 %v491, %v632
        %634 = vmatprep.mubr.bf16.mxu0 0
        %635 = vmatmul.mubr.bf16.gmra.mrb[0].mxu0 %v571
        %v636 = vpop.f32.mrb[0].mxu0
        %v637 = vadd.f32 %v496, %v636
        %v638 = vpop.f32.mrb[0].mxu0
        %v639 = vadd.f32 %v496, %v638
        %v640 = vpop.f32.mrb[0].mxu0
        %v641 = vadd.f32 %v501, %v640
        %v642 = vpop.f32.mrb[0].mxu0
        %v643 = vadd.f32 %v501, %v642
        %644 = vmatprep.mubr.bf16.mxu0 0
        %645 = vmatmul.mubr.bf16.gmra.mrb[0].mxu0 %v574
        %v646 = vpop.f32.mrb[0].mxu0
        %v647 = vadd.f32 %v506, %v646
        %v648 = vpop.f32.mrb[0].mxu0
        %v649 = vadd.f32 %v506, %v648
        %v650 = vpop.f32.mrb[0].mxu0
        %v651 = vadd.f32 %v511, %v650
        %v652 = vpop.f32.mrb[0].mxu0
        %v653 = vadd.f32 %v511, %v652
        %654 = vmatprep.mubr.bf16.mxu0 0
        %655 = vmatmul.mubr.bf16.gmra.mrb[0].mxu0 %v577
        %v656 = vpop.f32.mrb[0].mxu0
        %v657 = vadd.f32 %v516, %v656
        %v658 = vpop.f32.mrb[0].mxu0
        %v659 = vadd.f32 %v516, %v658
        %v660 = vpop.f32.mrb[0].mxu0
        %v661 = vadd.f32 %v521, %v660
        %v662 = vpop.f32.mrb[0].mxu0
        %v663 = vadd.f32 %v521, %v662
        %664 = vmatprep.mubr.bf16.mxu0 0
        %665 = vmatmul.mubr.bf16.gmra.mrb[0].mxu0 %v580
        %v666 = vpop.f32.mrb[0].mxu0
        %v667 = vadd.f32 %v526, %v666
        %v668 = vpop.f32.mrb[0].mxu0
        %v669 = vadd.f32 %v526, %v668
        %v670 = vpop.f32.mrb[0].mxu0
        %v671 = vadd.f32 %v531, %v670
        %v672 = vpop.f32.mrb[0].mxu0
        %v673 = vadd.f32 %v531, %v672
        %674 = vdwg.mxu0
        %v675 = vmul.f32 %v617, 0.17677669
        %v676 = vmul.f32 %v619, 0.17677669
        %v677 = vmul.f32 %v621, 0.17677669
        %v678 = vmul.f32 %v623, 0.17677669
        %v679 = vmul.f32 %v627, 0.17677669
        %v680 = vmul.f32 %v629, 0.17677669
        %v681 = vmul.f32 %v631, 0.17677669
        %v682 = vmul.f32 %v633, 0.17677669
        %v683 = vpack.c.bf16 %v677, %v675
        %v684 = vpack.c.bf16 %v678, %v676
        %v685 = vpack.c.bf16 %v681, %v679
        %v686 = vpack.c.bf16 %v682, %v680
        %v691 = vunpack.c.l.b16 %v683
        %v692 = vunpack.c.l.b16 %v684
        %v693 = vunpack.c.h.b16 %v683
        %v694 = vunpack.c.h.b16 %v684
        %v695 = vunpack.c.l.b16 %v685
        %v696 = vunpack.c.l.b16 %v686
        %v697 = vunpack.c.h.b16 %v685
        %v698 = vunpack.c.h.b16 %v686
        %v699 = vpack.c.b16 %v692, %v691
        %v700 = vpack.c.b16 %v694, %v693
        %v701 = vpack.c.b16 %v696, %v695
        %v702 = vpack.c.b16 %v698, %v697
        %707 = vst [vmem:[%s334] sm:$0xff] %v699
        %708 = vst [vmem:[%s334 + $0x8] sm:$0xff] %v700
        %709 = vst [vmem:[%s334 + $0x10] sm:$0xff] %v701
        %710 = vst [vmem:[%s334 + $0x18] sm:$0xff] %v702
        %v711 = vpack.c.bf16 %v641, %v637
        %v712 = vpack.c.bf16 %v643, %v639
        %v713 = vpack.c.bf16 %v651, %v647
        %v714 = vpack.c.bf16 %v653, %v649
        %v719 = vunpack.c.l.b16 %v711
        %v720 = vunpack.c.l.b16 %v712
        %v721 = vunpack.c.h.b16 %v711
        %v722 = vunpack.c.h.b16 %v712
        %v723 = vunpack.c.l.b16 %v713
        %v724 = vunpack.c.l.b16 %v714
        %v725 = vunpack.c.h.b16 %v713
        %v726 = vunpack.c.h.b16 %v714
        %v727 = vpack.c.b16 %v720, %v719
        %v728 = vpack.c.b16 %v722, %v721
        %v729 = vpack.c.b16 %v724, %v723
        %v730 = vpack.c.b16 %v726, %v725
        %735 = vst [vmem:[%s341] sm:$0xff] %v727
        %736 = vst [vmem:[%s341 + $0x8] sm:$0xff] %v728
        %737 = vst [vmem:[%s341 + $0x10] sm:$0xff] %v729
        %738 = vst [vmem:[%s341 + $0x18] sm:$0xff] %v730
        %v739 = vpack.c.bf16 %v661, %v657
        %v740 = vpack.c.bf16 %v663, %v659
        %v741 = vpack.c.bf16 %v671, %v667
        %v742 = vpack.c.bf16 %v673, %v669
        %v747 = vunpack.c.l.b16 %v739
        %v748 = vunpack.c.l.b16 %v740
        %v749 = vunpack.c.h.b16 %v739
        %v750 = vunpack.c.h.b16 %v740
        %v751 = vunpack.c.l.b16 %v741
        %v752 = vunpack.c.l.b16 %v742
        %v753 = vunpack.c.h.b16 %v741
        %v754 = vunpack.c.h.b16 %v742
        %v755 = vpack.c.b16 %v748, %v747
        %v756 = vpack.c.b16 %v750, %v749
        %v757 = vpack.c.b16 %v752, %v751
        %v758 = vpack.c.b16 %v754, %v753
        %763 = vst [vmem:[%s348] sm:$0xff] %v755
        %764 = vst [vmem:[%s348 + $0x8] sm:$0xff] %v756
        %765 = vst [vmem:[%s348 + $0x10] sm:$0xff] %v757
        %766 = vst [vmem:[%s348 + $0x18] sm:$0xff] %v758
        %s767 = sand.u32 %s169, 1
        %s768 = scalar_lea.sflag [#allocation3], %s767
        %s769 = sand.u32 %s169, 1
        %s770 = smul.addr %s769, 32
        %s771 = scalar_lea.vmem [#allocation2], %s770
        %s772 = sand.u32 %s25, 1
        %s773 = scalar_lea.sflag [#allocation5], %s772
        %s774 = sand.u32 %s197, 1
        %s775 = smul.addr %s774, 32
        %s776 = scalar_lea.vmem [#allocation4], %s775
        %s777 = sand.u32 %s25, 1
        %s778 = scalar_lea.sflag [#allocation5], %s777
        %s779 = sand.u32 %s225, 1
        %s780 = smul.addr %s779, 32
        %s781 = scalar_lea.vmem [#allocation6], %s780
        // Predicated region
        $region41: #{tpu_custom_call.1} parent=39 // pred_check
          %p782 = pneg %p179
        $region42: #{tpu_custom_call.1} parent=39 // pred_check_branch
          %784 = sbr.rel (%p782) target = $region44
        $region43: #{tpu_custom_call.1} parent=39 // pred_region
          %s785 = smul.u32 2, %s30
          %s787 = ssub.s32 512, 512
          %788 = vsyncadd %s768, %s787
          %s789 = smul.addr %s29, 8
          %s790 = sadd.s32 %s785, %s789
          %s791 = smul.addr %s790, 64
          %s792 = scalar_lea.hbm %s5, %s791
          %s793 = sshll.u32 %s771, 4
          %s794 = int_to_ptr.vmem [resolvable:$true] %s793
          %799 = dma.vmem_to_hbm [thread:$0]  %s794, 512, %s792, %s768, 128, 128, 8
        $region44: #{tpu_custom_call.1} parent=39 // pred_fallthru
          _
        // Predicated region
        $region45: #{tpu_custom_call.1} parent=39 // pred_check
          %p800 = pneg %p207
        $region46: #{tpu_custom_call.1} parent=39 // pred_check_branch
          %802 = sbr.rel (%p800) target = $region48
        $region47: #{tpu_custom_call.1} parent=39 // pred_region
          %s803 = smul.u32 2, %s30
          %s805 = ssub.s32 512, 512
          %806 = vsyncadd %s773, %s805
          %s807 = smul.addr %s29, 8
          %s808 = sadd.s32 %s803, %s807
          %s809 = smul.addr %s808, 64
          %s810 = scalar_lea.hbm %s6, %s809
          %s811 = sshll.u32 %s776, 4
          %s812 = int_to_ptr.vmem [resolvable:$true] %s811
          %817 = dma.vmem_to_hbm [thread:$0]  %s812, 512, %s810, %s773, 128, 128, 8
        $region48: #{tpu_custom_call.1} parent=39 // pred_fallthru
          _
        // Predicated region
        $region49: #{tpu_custom_call.1} parent=39 // pred_check
          %p818 = pneg %p235
        $region50: #{tpu_custom_call.1} parent=39 // pred_check_branch
          %820 = sbr.rel (%p818) target = $region52
        $region51: #{tpu_custom_call.1} parent=39 // pred_region
          %s821 = smul.u32 2, %s30
          %s823 = ssub.s32 512, 512
          %824 = vsyncadd %s778, %s823
          %s825 = smul.addr %s29, 8
          %s826 = sadd.s32 %s821, %s825
          %s827 = smul.addr %s826, 64
          %s828 = scalar_lea.hbm %s7, %s827
          %s829 = sshll.u32 %s781, 4
          %s830 = int_to_ptr.vmem [resolvable:$true] %s829
          %835 = dma.vmem_to_hbm [thread:$0]  %s830, 512, %s828, %s778, 128, 128, 8
        $region52: #{tpu_custom_call.1} parent=39 // pred_fallthru
          _
      $region40: #{tpu_custom_call.1} parent=5 // pred_fallthru
        _
      %p836 = scmp.le.s32.totalorder 2, %s20
      // Predicated region
      $region53: #{tpu_custom_call.1} parent=5 // pred_check
        %p837 = pneg %p836
      $region54: #{tpu_custom_call.1} parent=5 // pred_check_branch
        %839 = sbr.rel (%p837) target = $region56
      $region55: #{tpu_custom_call.1} parent=5 // pred_region
        %s840 = ssub.s32 %s20, 2
        // Predicated region
        $region57: #{tpu_custom_call.1} parent=55 // pred_check
          %p841 = pneg %p185
        $region58: #{tpu_custom_call.1} parent=55 // pred_check_branch
          %843 = sbr.rel (%p841) target = $region60
        $region59: #{tpu_custom_call.1} parent=55 // pred_region
          %s844 = sand.u32 %s170, 1
          %s845 = scalar_lea.sflag [#allocation3], %s844
          %s846 = sand.u32 %s170, 1
          %s847 = smul.addr %s846, 32
          %s848 = scalar_lea.vmem [#allocation2], %s847
          %849 = dma.done %s845, 512
        $region60: #{tpu_custom_call.1} parent=55 // pred_fallthru
          _
        // Predicated region
        $region61: #{tpu_custom_call.1} parent=55 // pred_check
          %p850 = pneg %p213
        $region62: #{tpu_custom_call.1} parent=55 // pred_check_branch
          %852 = sbr.rel (%p850) target = $region64
        $region63: #{tpu_custom_call.1} parent=55 // pred_region
          %s853 = sand.u32 %s26, 1
          %s854 = scalar_lea.sflag [#allocation5], %s853
          %s855 = sand.u32 %s198, 1
          %s856 = smul.addr %s855, 32
          %s857 = scalar_lea.vmem [#allocation4], %s856
          %858 = dma.done %s854, 512
        $region64: #{tpu_custom_call.1} parent=55 // pred_fallthru
          _
        // Predicated region
        $region65: #{tpu_custom_call.1} parent=55 // pred_check
          %p859 = pneg %p241
        $region66: #{tpu_custom_call.1} parent=55 // pred_check_branch
          %861 = sbr.rel (%p859) target = $region68
        $region67: #{tpu_custom_call.1} parent=55 // pred_region
          %s862 = sand.u32 %s26, 1
          %s863 = scalar_lea.sflag [#allocation5], %s862
          %s864 = sand.u32 %s226, 1
          %s865 = smul.addr %s864, 32
          %s866 = scalar_lea.vmem [#allocation6], %s865
          %867 = dma.done %s863, 512
        $region68: #{tpu_custom_call.1} parent=55 // pred_fallthru
          _
      $region56: #{tpu_custom_call.1} parent=5 // pred_fallthru
        _
    $region6: #{tpu_custom_call.1} parent=1 // loop_footer
      %s24 = sadd.s32 1, %s20
    $region7: #{tpu_custom_call.1} parent=1 // loop_footer_branch
      %19 = sbr.rel target = $region3
    $region8: #{tpu_custom_call.1} parent=1 // loop_exit
      _
    %868 = vsyncpa [#allocation3], 1
    %s869 = scalar_lea.sflag [#allocation3], 1
    %870 = vsyncpa %s869, 1
    %871 = vsyncpa [#allocation5], 1
    %s872 = scalar_lea.sflag [#allocation5], 1
    %873 = vsyncpa %s872, 1

</llo_original>
